<compile_context>
chip_gen: v7x
topology: tpu7x:2x2x1
jax: 0.10.0
libtpu: 0.0.40
codegen_flags: <defaults>
</compile_context>

<pallas_src>
import functools

import jax
import jax.numpy as jnp
from jax.experimental import pallas as pl
from jax.experimental.pallas import tpu as pltpu

_LANE = 128


def _round_up(x, m):
    return (x + m - 1) // m * m


# -----------------------------------------------------------------------------
# Kernel 1: projection  Wh = h @ W  and fused attention-score matvec
#           S = Wh @ [a1 | a2 | 0...]   (single MXU op, lane-dense result)
# -----------------------------------------------------------------------------
def _project_kernel(h_ref, w_ref, a12_ref, wh_ref, s_ref):
    h = h_ref[...].astype(jnp.float32)                                  # [N, Fin]
    w = w_ref[...].astype(jnp.float32)                                  # [Fin, Fp]
    wh = jnp.dot(h, w, preferred_element_type=jnp.float32)              # [N, Fp]
    s = jnp.dot(wh, a12_ref[...], preferred_element_type=jnp.float32)   # [N, 128]
    wh_ref[...] = wh.astype(wh_ref.dtype)   # bf16 on the fast path (halves VMEM/HBM)
    s_ref[...] = s                          # col 0 = Wh@a1, col 1 = Wh@a2 (f32)


# -----------------------------------------------------------------------------
# Kernel 2: per-row-tile masked softmax attention + att @ Wh (+ ELU if concat)
# -----------------------------------------------------------------------------
def _attn_kernel(adj_ref, s_ref, s2row_ref, wh_ref, out_ref, *, alpha, concat):
    # e[q, k] = LeakyReLU( s1[q] + s2[k] )
    s1 = s_ref[:, 0:1]                                   # [TQ, 1] f32 (query scores)
    e = s1 + s2row_ref[...]                              # [TQ, N] broadcast add
    e = jnp.where(e > 0, e, alpha * e)                   # LeakyReLU(alpha)

    # Adjacency mask streamed as int8 (>0 means edge in the original module).
    att = jnp.where(adj_ref[...] != 0, e, jnp.float32(-9e15))

    # Row softmax (dim=1), kept in f32; reciprocal goes to the otherwise-idle EUP.
    m = jnp.max(att, axis=1, keepdims=True)
    p = jnp.exp(att - m)
    denom = jnp.sum(p, axis=1, keepdims=True)
    att = p * pl.reciprocal(denom, approx=True)

    # FLOP-dominant matmul; Wh is resident and already in the MXU operand dtype.
    h_prime = jnp.dot(att.astype(wh_ref.dtype), wh_ref[...],
                      preferred_element_type=jnp.float32)               # [TQ, Fp]

    if concat:                                           # ELU (alpha = 1.0)
        neg = jnp.exp(jnp.minimum(h_prime, 0.0)) - 1.0   # no inf in the dead branch
        h_prime = jnp.where(h_prime > 0, h_prime, neg)
    out_ref[...] = h_prime.astype(out_ref.dtype)


def gat_forward(h, adj, W, a, *, alpha=0.2, concat=True,
                mxu_dtype=jnp.bfloat16, row_tile=None):
    """GraphAttentionLayer forward (inference; attention dropout is identity).

    h [N, Fin], adj [N, N] (>0 == edge), W [Fin, Fout], a [2*Fout, 1].
    `mxu_dtype` is the operand dtype for att @ Wh (f32 accumulation). bf16 is the
    recommended fast path on v6e/v7x; pass jnp.float32 for strict f32 parity.
    """
    N, f_in = h.shape
    f_out = W.shape[1]
    fp = _round_up(f_out, _LANE)            # lane-dense padded feature width

    # ---- layout plumbing (cheap XLA ops outside the kernels) ----
    h = h.astype(jnp.float32)
    w_p = jnp.zeros((f_in, fp), jnp.float32).at[:, :f_out].set(W.astype(jnp.float32))
    a12 = jnp.zeros((fp, _LANE), jnp.float32)
    a12 = a12.at[:f_out, 0].set(a[:f_out, 0].astype(jnp.float32))   # a1
    a12 = a12.at[:f_out, 1].set(a[f_out:, 0].astype(jnp.float32))   # a2
    adj_i8 = (adj > 0).astype(jnp.int8)     # 4x less HBM/VMEM than f32 adjacency

    # ---- kernel 1: Wh and fused attention scores (single grid point) ----
    full = lambda shape: pl.BlockSpec(shape, lambda: (0,) * len(shape))
    wh, s = pl.pallas_call(
        _project_kernel,
        out_shape=(jax.ShapeDtypeStruct((N, fp), mxu_dtype),
                   jax.ShapeDtypeStruct((N, _LANE), jnp.float32)),
        in_specs=[full((N, f_in)), full((f_in, fp)), full((fp, _LANE))],
        out_specs=(full((N, fp)), full((N, _LANE))),
    )(h, w_p, a12)

    # Key-side scores staged ONCE as a lane-dense [1, N] row (layout plumbing).
    s2_row = s[:, 1].reshape(1, N)

    # ---- kernel 2: row-tiled masked softmax + att @ Wh ----
    if row_tile is None:
        row_tile = next((t for t in (256, 128) if N % t == 0), N)
    tq = row_tile
    assert N % tq == 0, "row_tile must divide N"

    out_p = pl.pallas_call(
        functools.partial(_attn_kernel, alpha=float(alpha), concat=bool(concat)),
        out_shape=jax.ShapeDtypeStruct((N, fp), jnp.float32),
        grid_spec=pltpu.PrefetchScalarGridSpec(
            num_scalar_prefetch=0,
            grid=(N // tq,),
            in_specs=[
                pl.BlockSpec((tq, N), lambda i: (i, 0)),      # adj slab (int8, streamed)
                pl.BlockSpec((tq, _LANE), lambda i: (i, 0)),  # per-query scores
                pl.BlockSpec((1, N), lambda i: (0, 0)),       # key-side scores (resident)
                pl.BlockSpec((N, fp), lambda i: (0, 0)),      # Wh (resident)
            ],
            out_specs=pl.BlockSpec((tq, fp), lambda i: (i, 0)),
        ),
        compiler_params=pltpu.CompilerParams(
            # Independent row tiles -> shardable across v7x's two TensorCores.
            dimension_semantics=("parallel",),
            # Budget against v7x: 64 MiB physical VMEM / 32 MiB scoped default.
            vmem_limit_bytes=48 * 1024 * 1024,
        ),
    )(adj_i8, s, s2_row, wh)

    # TODO(synk): for N large enough that a full [TQ, N] key axis no longer fits
    # VMEM, add flash-style online-softmax tiling over the key axis as well.
    return out_p[:, :f_out]


# -----------------------------------------------------------------------------
# Self-test
# -----------------------------------------------------------------------------
def _xavier_uniform(key, shape, gain):
    fan_in, fan_out = shape
    bound = gain * (6.0 / (fan_in + fan_out)) ** 0.5
    return jax.random.uniform(key, shape, jnp.float32, -bound, bound)


def _reference(h, adj, W, a, alpha):
    f_out = W.shape[1]
    Wh = h @ W
    e = jax.nn.leaky_relu(Wh @ a[:f_out] + (Wh @ a[f_out:]).T, alpha)
    att = jax.nn.softmax(jnp.where(adj > 0, e, -9e15), axis=1)
    return jax.nn.elu(att @ Wh)


if __name__ == "__main__":
    # NOTE: for many tiny graphs, stack them (block-diagonal adjacency / batched
    # rows) into one call to amortize launch overhead and fill vregs/MXU.
    alpha = 0.2
    gain = 1.414

    def make_inputs(key, n, f_in, f_out):
        k_h, k_adj, k_w, k_a = jax.random.split(key, 4)
        h = jax.random.normal(k_h, (n, f_in), jnp.float32)
        adj = (jax.random.uniform(k_adj, (n, n)) > 0.7).astype(jnp.float32)
        adj = jnp.maximum(adj, jnp.eye(n, dtype=jnp.float32))  # self loops
        W = _xavier_uniform(k_w, (f_in, f_out), gain)
        a = _xavier_uniform(k_a, (2 * f_out, 1), gain)
        return h, adj, W, a

    key = jax.random.PRNGKey(0)
    k0, k1 = jax.random.split(key)

    # Case 1: multi-tile grid (N=256, TQ=128), strict f32 MXU path.
    h, adj, W, a = make_inputs(k0, 256, 16, 32)
    out = gat_forward(h, adj, W, a, alpha=alpha,
                      mxu_dtype=jnp.float32, row_tile=128)
    jax.block_until_ready(out)
    ref = _reference(h, adj, W, a, alpha)
    assert jnp.allclose(out, ref, atol=1e-3, rtol=1e-2), "f32 path mismatch"

    # Case 1b: same inputs, bf16 MXU operands (v6e/v7x fast path), f32 accumulation.
    out_bf16 = gat_forward(h, adj, W, a, alpha=alpha,
                           mxu_dtype=jnp.bfloat16, row_tile=128)
    jax.block_until_ready(out_bf16)
    assert jnp.allclose(out_bf16, ref, atol=5e-2, rtol=5e-2), "bf16 path mismatch"

    # Case 2: odd single-tile shape (N=48, Fout=8 padded to 128 output lanes).
    h2, adj2, W2, a2 = make_inputs(k1, 48, 16, 8)
    out2 = gat_forward(h2, adj2, W2, a2, alpha=alpha, mxu_dtype=jnp.float32)
    jax.block_until_ready(out2)
    ref2 = _reference(h2, adj2, W2, a2, alpha)
    assert jnp.allclose(out2, ref2, atol=1e-3, rtol=1e-2), "single-tile mismatch"

    print("KERNEL_OK")
</pallas_src>

<mosaic_0001>
module attributes {stable_mosaic.version = 11 : i64} {
  func.func @_project_kernel(%arg0: memref<256x16xf32, #tpu.memory_space<vmem>>, %arg1: memref<16x128xf32, #tpu.memory_space<vmem>>, %arg2: memref<128x128xf32, #tpu.memory_space<vmem>>, %arg3: memref<256x128xf32, #tpu.memory_space<vmem>>, %arg4: memref<256x128xf32, #tpu.memory_space<vmem>>) attributes {dimension_semantics = [], scalar_prefetch = 0 : i64, scratch_operands = 0 : i64, tpu.core_type = #tpu.core_type<tc>} {
    %c0 = arith.constant 0 : index
    %c0_0 = arith.constant 0 : index
    %0 = vector.load %arg0[%c0, %c0_0] : memref<256x16xf32, #tpu.memory_space<vmem>>, vector<256x16xf32>
    %c0_1 = arith.constant 0 : index
    %c0_2 = arith.constant 0 : index
    %1 = vector.load %arg1[%c0_1, %c0_2] : memref<16x128xf32, #tpu.memory_space<vmem>>, vector<16x128xf32>
    %cst = arith.constant dense<0.000000e+00> : vector<256x128xf32>
    %2 = tpu.matmul %0, %1, %cst {dimension_numbers = #tpu.dot_dimension_numbers<[1], [0], [0], [1], [0, 0, 1, 1], [], []>} : vector<256x16xf32>, vector<16x128xf32>, vector<256x128xf32> -> vector<256x128xf32>
    %c0_3 = arith.constant 0 : index
    %c0_4 = arith.constant 0 : index
    %3 = vector.load %arg2[%c0_3, %c0_4] : memref<128x128xf32, #tpu.memory_space<vmem>>, vector<128x128xf32>
    %cst_5 = arith.constant dense<0.000000e+00> : vector<256x128xf32>
    %4 = tpu.matmul %2, %3, %cst_5 {dimension_numbers = #tpu.dot_dimension_numbers<[1], [0], [0], [1], [0, 0, 1, 1], [], []>} : vector<256x128xf32>, vector<128x128xf32>, vector<256x128xf32> -> vector<256x128xf32>
    %c0_6 = arith.constant 0 : index
    %c0_7 = arith.constant 0 : index
    %5 = vector.load %arg3[%c0_6, %c0_7] : memref<256x128xf32, #tpu.memory_space<vmem>>, vector<256x128xf32>
    tpu.vector_store %arg3[%c0_6, %c0_7], %2 {strides = array<i32>} : memref<256x128xf32, #tpu.memory_space<vmem>>, vector<256x128xf32>,
    %c0_8 = arith.constant 0 : index
    %c0_9 = arith.constant 0 : index
    %6 = vector.load %arg4[%c0_8, %c0_9] : memref<256x128xf32, #tpu.memory_space<vmem>>, vector<256x128xf32>
    tpu.vector_store %arg4[%c0_8, %c0_9], %4 {strides = array<i32>} : memref<256x128xf32, #tpu.memory_space<vmem>>, vector<256x128xf32>,
    return
  }
}

</mosaic_0001>

<llo_original>
// kernel: tpu_custom_call.1
$region0: #{tpu_custom_call.1}
  #allocation0 [shape = 'u32[]', space=smem, size = 0x4, offset = 0x4, fixed_abs, tag = 'smem constant byte address 0x4 - core index']
  #allocation1 [shape = 'u32[144,128]{1,0:T(1,128)}', space=vmem, size = 0x12000, scoped, tag = 'internal scratch']
  %s0 = inlined_call_operand.vmem [shape: f32[256,16], index: 0, kind: input, shape index: {}]
  %s1 = inlined_call_operand.vmem [shape: f32[16,128], index: 1, kind: input, shape index: {}]
  %s2 = inlined_call_operand.vmem [shape: f32[128,128], index: 2, kind: input, shape index: {}]
  %s3 = inlined_call_operand.hbm [shape: f32[256,128], index: 3, kind: output, shape index: {0}]
  %s4 = inlined_call_operand.hbm [shape: f32[256,128], index: 4, kind: output, shape index: {1}]
  %5 = xla_tuple %s3, %s4
  %s6 = sld [smem:[#allocation0]]
  $region30: #{tpu_custom_call.1} parent=0
    _
  %s8 = ssub.s32 1, %s6
  %s9 = scalar_select 0, %s8, %s6
  $region1: #{tpu_custom_call.1} parent=0
    #allocation2 [shape = 'u8[131072]{0}', space=vmem, size = 0x20000, scoped, tag = 'output window, operand 0, single buffered']
    #allocation3 [shape = 's32[1]{0}', space=sflag, size = 0x4, scoped, tag = 'scoped memory for tpu_custom_call.1']
    #allocation4 [shape = 'u8[131072]{0}', space=vmem, size = 0x20000, scoped, tag = 'output window, operand 1, single buffered']
    #allocation5 [shape = 's32[1]{0}', space=sflag, size = 0x4, scoped, tag = 'scoped memory for tpu_custom_call.1']
    %10 = vsyncpa [#allocation3], 0
    %11 = vsyncpa [#allocation5], 0
    // Predicated region
    $region2: #{tpu_custom_call.1} parent=1 // pred_check
      _
    $region3: #{tpu_custom_call.1} parent=1 // pred_check_branch
      %13 = sbr.rel (0) target = $region5
    $region4: #{tpu_custom_call.1} parent=1 // pred_region
      _
    $region5: #{tpu_custom_call.1} parent=1 // pred_fallthru
      _
    // Predicated region
    $region6: #{tpu_custom_call.1} parent=1 // pred_check
      _
    $region7: #{tpu_custom_call.1} parent=1 // pred_check_branch
      %15 = sbr.rel (0) target = $region9
    $region8: #{tpu_custom_call.1} parent=1 // pred_region
      _
    $region9: #{tpu_custom_call.1} parent=1 // pred_fallthru
      _
    // Predicated region
    $region10: #{tpu_custom_call.1} parent=1 // pred_check
      _
    $region11: #{tpu_custom_call.1} parent=1 // pred_check_branch
      %17 = sbr.rel (0) target = $region13
    $region12: #{tpu_custom_call.1} parent=1 // pred_region
      _
    $region13: #{tpu_custom_call.1} parent=1 // pred_fallthru
      _
    %v18 = vld [vmem:[%s0] sm:$0xff]
    %v19 = vld [vmem:[%s0 + $0x8] sm:$0xff]
    %v20 = vld [vmem:[%s0 + $0x10] sm:$0xff]
    %v21 = vld [vmem:[%s0 + $0x18] sm:$0xff]
    %v22 = vld [vmem:[%s0 + $0x20] sm:$0xff]
    %v23 = vld [vmem:[%s0 + $0x28] sm:$0xff]
    %v24 = vld [vmem:[%s0 + $0x30] sm:$0xff]
    %v25 = vld [vmem:[%s0 + $0x38] sm:$0xff]
    %v26 = vld [vmem:[%s0 + $0x40] sm:$0xff]
    %v27 = vld [vmem:[%s0 + $0x48] sm:$0xff]
    %v28 = vld [vmem:[%s0 + $0x50] sm:$0xff]
    %v29 = vld [vmem:[%s0 + $0x58] sm:$0xff]
    %v30 = vld [vmem:[%s0 + $0x60] sm:$0xff]
    %v31 = vld [vmem:[%s0 + $0x68] sm:$0xff]
    %v32 = vld [vmem:[%s0 + $0x70] sm:$0xff]
    %v33 = vld [vmem:[%s0 + $0x78] sm:$0xff]
    %v34 = vld [vmem:[%s0 + $0x80] sm:$0xff]
    %v35 = vld [vmem:[%s0 + $0x88] sm:$0xff]
    %v36 = vld [vmem:[%s0 + $0x90] sm:$0xff]
    %v37 = vld [vmem:[%s0 + $0x98] sm:$0xff]
    %v38 = vld [vmem:[%s0 + $0xa0] sm:$0xff]
    %v39 = vld [vmem:[%s0 + $0xa8] sm:$0xff]
    %v40 = vld [vmem:[%s0 + $0xb0] sm:$0xff]
    %v41 = vld [vmem:[%s0 + $0xb8] sm:$0xff]
    %v42 = vld [vmem:[%s0 + $0xc0] sm:$0xff]
    %v43 = vld [vmem:[%s0 + $0xc8] sm:$0xff]
    %v44 = vld [vmem:[%s0 + $0xd0] sm:$0xff]
    %v45 = vld [vmem:[%s0 + $0xd8] sm:$0xff]
    %v46 = vld [vmem:[%s0 + $0xe0] sm:$0xff]
    %v47 = vld [vmem:[%s0 + $0xe8] sm:$0xff]
    %v48 = vld [vmem:[%s0 + $0xf0] sm:$0xff]
    %v49 = vld [vmem:[%s0 + $0xf8] sm:$0xff]
    %v50 = vld [vmem:[%s1] sm:$0xff]
    %v51 = vld [vmem:[%s1 + $0x8] sm:$0xff]
    %vm52 = vcmask 130048
    %v54 = vsel %vm52, %v18, 0
    %v57 = vsel %vm52, %v19, 0
    %v60 = vsel %vm52, %v20, 0
    %v63 = vsel %vm52, %v21, 0
    %v66 = vsel %vm52, %v22, 0
    %v69 = vsel %vm52, %v23, 0
    %v72 = vsel %vm52, %v24, 0
    %v75 = vsel %vm52, %v25, 0
    %v78 = vsel %vm52, %v26, 0
    %v81 = vsel %vm52, %v27, 0
    %v84 = vsel %vm52, %v28, 0
    %v87 = vsel %vm52, %v29, 0
    %v90 = vsel %vm52, %v30, 0
    %v93 = vsel %vm52, %v31, 0
    %v96 = vsel %vm52, %v32, 0
    %v99 = vsel %vm52, %v33, 0
    %v102 = vsel %vm52, %v34, 0
    %v105 = vsel %vm52, %v35, 0
    %v108 = vsel %vm52, %v36, 0
    %v111 = vsel %vm52, %v37, 0
    %v114 = vsel %vm52, %v38, 0
    %v117 = vsel %vm52, %v39, 0
    %v120 = vsel %vm52, %v40, 0
    %v123 = vsel %vm52, %v41, 0
    %v126 = vsel %vm52, %v42, 0
    %v129 = vsel %vm52, %v43, 0
    %v132 = vsel %vm52, %v44, 0
    %v135 = vsel %vm52, %v45, 0
    %v138 = vsel %vm52, %v46, 0
    %v141 = vsel %vm52, %v47, 0
    %v144 = vsel %vm52, %v48, 0
    %v147 = vsel %vm52, %v49, 0
    %149 = vmatprep.subr.mxu0 0.0
    %150 = vmatpush1.msra.mxu0 %v50
    %151 = vmatprep.subr.mxu0 0.0
    %152 = vmatpush1.msra.mxu0 %v51
    %153 = vmatprep.subr.mxu0 0.0
    %154 = vmatpush1.msra.mxu0 0.0
    %155 = vmatprep.subr.mxu0 0.0
    %156 = vmatpush1.msra.mxu0 0.0
    %157 = vmatprep.subr.mxu0 0.0
    %158 = vmatpush1.msra.mxu0 0.0
    %159 = vmatprep.subr.mxu0 0.0
    %160 = vmatpush1.msra.mxu0 0.0
    %161 = vmatprep.subr.mxu0 0.0
    %162 = vmatpush1.msra.mxu0 0.0
    %163 = vmatprep.subr.mxu0 0.0
    %164 = vmatpush1.msra.mxu0 0.0
    %165 = vmatprep.subr.mxu0 0.0
    %166 = vmatpush1.msra.mxu0 0.0
    %167 = vmatprep.subr.mxu0 0.0
    %168 = vmatpush1.msra.mxu0 0.0
    %169 = vmatprep.subr.mxu0 0.0
    %170 = vmatpush1.msra.mxu0 0.0
    %171 = vmatprep.subr.mxu0 0.0
    %172 = vmatpush1.msra.mxu0 0.0
    %173 = vmatprep.subr.mxu0 0.0
    %174 = vmatpush1.msra.mxu0 0.0
    %175 = vmatprep.subr.mxu0 0.0
    %176 = vmatpush1.msra.mxu0 0.0
    %177 = vmatprep.subr.mxu0 0.0
    %178 = vmatpush1.msra.mxu0 0.0
    %179 = vmatprep.subr.mxu0 0.0
    %180 = vmatpush1.msra.mxu0 0.0
    %181 = vmatprep.subr.mxu0 0.0
    %182 = vmatpush1.msra.mxu0 0.0
    %183 = vmatprep.subr.mxu0 0.0
    %184 = vmatpush1.msra.mxu0 0.0
    %185 = vmatprep.subr.mxu0 0.0
    %186 = vmatpush1.msra.mxu0 0.0
    %187 = vmatprep.subr.mxu0 0.0
    %188 = vmatpush1.msra.mxu0 0.0
    %189 = vmatprep.subr.mxu0 0.0
    %190 = vmatpush1.msra.mxu0 0.0
    %191 = vmatprep.subr.mxu0 0.0
    %192 = vmatpush1.msra.mxu0 0.0
    %193 = vmatprep.subr.mxu0 0.0
    %194 = vmatpush1.msra.mxu0 0.0
    %195 = vmatprep.subr.mxu0 0.0
    %196 = vmatpush1.msra.mxu0 0.0
    %197 = vmatprep.subr.mxu0 0.0
    %198 = vmatpush1.msra.mxu0 0.0
    %199 = vmatprep.subr.mxu0 0.0
    %200 = vmatpush1.msra.mxu0 0.0
    %201 = vmatprep.subr.mxu0 0.0
    %202 = vmatpush1.msra.mxu0 0.0
    %203 = vmatprep.subr.mxu0 0.0
    %204 = vmatpush1.msra.mxu0 0.0
    %205 = vmatprep.subr.mxu0 0.0
    %206 = vmatpush1.msra.mxu0 0.0
    %207 = vmatprep.subr.mxu0 0.0
    %208 = vmatpush1.msra.mxu0 0.0
    %209 = vmatprep.subr.mxu0 0.0
    %210 = vmatpush1.msra.mxu0 0.0
    %211 = vmatprep.subr.mxu0 0.0
    %212 = vmatpush1.msra.mxu0 0.0
    %213 = vmatprep.mubr.f32.mxu0 0.0
    %214 = vmatmul.mubr.f32.gmra.mrb[0].mxu0 %v54
    %v215 = vpop.f32.mrb[0].mxu0
    %v216 = vadd.f32 0.0, %v215
    %v217 = vpop.f32.mrb[0].mxu0
    %218 = vmatprep.mubr.f32.mxu0 0.0
    %219 = vmatmul.mubr.f32.gmra.mrb[0].mxu0 %v57
    %v220 = vpop.f32.mrb[0].mxu0
    %v221 = vadd.f32 0.0, %v220
    %v222 = vpop.f32.mrb[0].mxu0
    %223 = vmatprep.mubr.f32.mxu0 0.0
    %224 = vmatmul.mubr.f32.gmra.mrb[0].mxu0 %v60
    %v225 = vpop.f32.mrb[0].mxu0
    %v226 = vadd.f32 0.0, %v225
    %v227 = vpop.f32.mrb[0].mxu0
    %228 = vmatprep.mubr.f32.mxu0 0.0
    %229 = vmatmul.mubr.f32.gmra.mrb[0].mxu0 %v63
    %v230 = vpop.f32.mrb[0].mxu0
    %v231 = vadd.f32 0.0, %v230
    %v232 = vpop.f32.mrb[0].mxu0
    %233 = vmatprep.mubr.f32.mxu0 0.0
    %234 = vmatmul.mubr.f32.gmra.mrb[0].mxu0 %v66
    %v235 = vpop.f32.mrb[0].mxu0
    %v236 = vadd.f32 0.0, %v235
    %v237 = vpop.f32.mrb[0].mxu0
    %238 = vmatprep.mubr.f32.mxu0 0.0
    %239 = vmatmul.mubr.f32.gmra.mrb[0].mxu0 %v69
    %v240 = vpop.f32.mrb[0].mxu0
    %v241 = vadd.f32 0.0, %v240
    %v242 = vpop.f32.mrb[0].mxu0
    %243 = vmatprep.mubr.f32.mxu0 0.0
    %244 = vmatmul.mubr.f32.gmra.mrb[0].mxu0 %v72
    %v245 = vpop.f32.mrb[0].mxu0
    %v246 = vadd.f32 0.0, %v245
    %v247 = vpop.f32.mrb[0].mxu0
    %248 = vmatprep.mubr.f32.mxu0 0.0
    %249 = vmatmul.mubr.f32.gmra.mrb[0].mxu0 %v75
    %v250 = vpop.f32.mrb[0].mxu0
    %v251 = vadd.f32 0.0, %v250
    %v252 = vpop.f32.mrb[0].mxu0
    %253 = vmatprep.mubr.f32.mxu0 0.0
    %254 = vmatmul.mubr.f32.gmra.mrb[0].mxu0 %v78
    %v255 = vpop.f32.mrb[0].mxu0
    %v256 = vadd.f32 0.0, %v255
    %v257 = vpop.f32.mrb[0].mxu0
    %258 = vmatprep.mubr.f32.mxu0 0.0
    %259 = vmatmul.mubr.f32.gmra.mrb[0].mxu0 %v81
    %v260 = vpop.f32.mrb[0].mxu0
    %v261 = vadd.f32 0.0, %v260
    %v262 = vpop.f32.mrb[0].mxu0
    %263 = vmatprep.mubr.f32.mxu0 0.0
    %264 = vmatmul.mubr.f32.gmra.mrb[0].mxu0 %v84
    %v265 = vpop.f32.mrb[0].mxu0
    %v266 = vadd.f32 0.0, %v265
    %v267 = vpop.f32.mrb[0].mxu0
    %268 = vmatprep.mubr.f32.mxu0 0.0
    %269 = vmatmul.mubr.f32.gmra.mrb[0].mxu0 %v87
    %v270 = vpop.f32.mrb[0].mxu0
    %v271 = vadd.f32 0.0, %v270
    %v272 = vpop.f32.mrb[0].mxu0
    %273 = vmatprep.mubr.f32.mxu0 0.0
    %274 = vmatmul.mubr.f32.gmra.mrb[0].mxu0 %v90
    %v275 = vpop.f32.mrb[0].mxu0
    %v276 = vadd.f32 0.0, %v275
    %v277 = vpop.f32.mrb[0].mxu0
    %278 = vmatprep.mubr.f32.mxu0 0.0
    %279 = vmatmul.mubr.f32.gmra.mrb[0].mxu0 %v93
    %v280 = vpop.f32.mrb[0].mxu0
    %v281 = vadd.f32 0.0, %v280
    %v282 = vpop.f32.mrb[0].mxu0
    %283 = vmatprep.mubr.f32.mxu0 0.0
    %284 = vmatmul.mubr.f32.gmra.mrb[0].mxu0 %v96
    %v285 = vpop.f32.mrb[0].mxu0
    %v286 = vadd.f32 0.0, %v285
    %v287 = vpop.f32.mrb[0].mxu0
    %288 = vmatprep.mubr.f32.mxu0 0.0
    %289 = vmatmul.mubr.f32.gmra.mrb[0].mxu0 %v99
    %v290 = vpop.f32.mrb[0].mxu0
    %v291 = vadd.f32 0.0, %v290
    %v292 = vpop.f32.mrb[0].mxu0
    %293 = vmatprep.mubr.f32.mxu0 0.0
    %294 = vmatmul.mubr.f32.gmra.mrb[0].mxu0 %v102
    %v295 = vpop.f32.mrb[0].mxu0
    %v296 = vadd.f32 0.0, %v295
    %v297 = vpop.f32.mrb[0].mxu0
    %298 = vmatprep.mubr.f32.mxu0 0.0
    %299 = vmatmul.mubr.f32.gmra.mrb[0].mxu0 %v105
    %v300 = vpop.f32.mrb[0].mxu0
    %v301 = vadd.f32 0.0, %v300
    %v302 = vpop.f32.mrb[0].mxu0
    %303 = vmatprep.mubr.f32.mxu0 0.0
    %304 = vmatmul.mubr.f32.gmra.mrb[0].mxu0 %v108
    %v305 = vpop.f32.mrb[0].mxu0
    %v306 = vadd.f32 0.0, %v305
    %v307 = vpop.f32.mrb[0].mxu0
    %308 = vmatprep.mubr.f32.mxu0 0.0
    %309 = vmatmul.mubr.f32.gmra.mrb[0].mxu0 %v111
    %v310 = vpop.f32.mrb[0].mxu0
    %v311 = vadd.f32 0.0, %v310
    %v312 = vpop.f32.mrb[0].mxu0
    %313 = vmatprep.mubr.f32.mxu0 0.0
    %314 = vmatmul.mubr.f32.gmra.mrb[0].mxu0 %v114
    %v315 = vpop.f32.mrb[0].mxu0
    %v316 = vadd.f32 0.0, %v315
    %v317 = vpop.f32.mrb[0].mxu0
    %318 = vmatprep.mubr.f32.mxu0 0.0
    %319 = vmatmul.mubr.f32.gmra.mrb[0].mxu0 %v117
    %v320 = vpop.f32.mrb[0].mxu0
    %v321 = vadd.f32 0.0, %v320
    %v322 = vpop.f32.mrb[0].mxu0
    %323 = vmatprep.mubr.f32.mxu0 0.0
    %324 = vmatmul.mubr.f32.gmra.mrb[0].mxu0 %v120
    %v325 = vpop.f32.mrb[0].mxu0
    %v326 = vadd.f32 0.0, %v325
    %v327 = vpop.f32.mrb[0].mxu0
    %328 = vmatprep.mubr.f32.mxu0 0.0
    %329 = vmatmul.mubr.f32.gmra.mrb[0].mxu0 %v123
    %v330 = vpop.f32.mrb[0].mxu0
    %v331 = vadd.f32 0.0, %v330
    %v332 = vpop.f32.mrb[0].mxu0
    %333 = vmatprep.mubr.f32.mxu0 0.0
    %334 = vmatmul.mubr.f32.gmra.mrb[0].mxu0 %v126
    %v335 = vpop.f32.mrb[0].mxu0
    %v336 = vadd.f32 0.0, %v335
    %v337 = vpop.f32.mrb[0].mxu0
    %338 = vmatprep.mubr.f32.mxu0 0.0
    %339 = vmatmul.mubr.f32.gmra.mrb[0].mxu0 %v129
    %v340 = vpop.f32.mrb[0].mxu0
    %v341 = vadd.f32 0.0, %v340
    %v342 = vpop.f32.mrb[0].mxu0
    %343 = vmatprep.mubr.f32.mxu0 0.0
    %344 = vmatmul.mubr.f32.gmra.mrb[0].mxu0 %v132
    %v345 = vpop.f32.mrb[0].mxu0
    %v346 = vadd.f32 0.0, %v345
    %v347 = vpop.f32.mrb[0].mxu0
    %348 = vmatprep.mubr.f32.mxu0 0.0
    %349 = vmatmul.mubr.f32.gmra.mrb[0].mxu0 %v135
    %v350 = vpop.f32.mrb[0].mxu0
    %v351 = vadd.f32 0.0, %v350
    %v352 = vpop.f32.mrb[0].mxu0
    %353 = vmatprep.mubr.f32.mxu0 0.0
    %354 = vmatmul.mubr.f32.gmra.mrb[0].mxu0 %v138
    %v355 = vpop.f32.mrb[0].mxu0
    %v356 = vadd.f32 0.0, %v355
    %v357 = vpop.f32.mrb[0].mxu0
    %358 = vmatprep.mubr.f32.mxu0 0.0
    %359 = vmatmul.mubr.f32.gmra.mrb[0].mxu0 %v141
    %v360 = vpop.f32.mrb[0].mxu0
    %v361 = vadd.f32 0.0, %v360
    %v362 = vpop.f32.mrb[0].mxu0
    %363 = vmatprep.mubr.f32.mxu0 0.0
    %364 = vmatmul.mubr.f32.gmra.mrb[0].mxu0 %v144
    %v365 = vpop.f32.mrb[0].mxu0
    %v366 = vadd.f32 0.0, %v365
    %v367 = vpop.f32.mrb[0].mxu0
    %368 = vmatprep.mubr.f32.mxu0 0.0
    %369 = vmatmul.mubr.f32.gmra.mrb[0].mxu0 %v147
    %v370 = vpop.f32.mrb[0].mxu0
    %v371 = vadd.f32 0.0, %v370
    %v372 = vpop.f32.mrb[0].mxu0
    %373 = vdwg.mxu0
    %v374 = vld [vmem:[%s2] sm:$0xff]
    %v375 = vld [vmem:[%s2 + $0x8] sm:$0xff]
    %v376 = vld [vmem:[%s2 + $0x10] sm:$0xff]
    %v377 = vld [vmem:[%s2 + $0x18] sm:$0xff]
    %v378 = vld [vmem:[%s2 + $0x20] sm:$0xff]
    %v379 = vld [vmem:[%s2 + $0x28] sm:$0xff]
    %v380 = vld [vmem:[%s2 + $0x30] sm:$0xff]
    %v381 = vld [vmem:[%s2 + $0x38] sm:$0xff]
    %v382 = vld [vmem:[%s2 + $0x40] sm:$0xff]
    %v383 = vld [vmem:[%s2 + $0x48] sm:$0xff]
    %v384 = vld [vmem:[%s2 + $0x50] sm:$0xff]
    %v385 = vld [vmem:[%s2 + $0x58] sm:$0xff]
    %v386 = vld [vmem:[%s2 + $0x60] sm:$0xff]
    %v387 = vld [vmem:[%s2 + $0x68] sm:$0xff]
    %v388 = vld [vmem:[%s2 + $0x70] sm:$0xff]
    %v389 = vld [vmem:[%s2 + $0x78] sm:$0xff]
    %390 = vmatprep.subr.mxu0 0.0
    %391 = vmatpush1.msra.mxu0 %v374
    %392 = vmatprep.subr.mxu0 0.0
    %393 = vmatpush1.msra.mxu0 %v375
    %394 = vmatprep.subr.mxu0 0.0
    %395 = vmatpush1.msra.mxu0 %v376
    %396 = vmatprep.subr.mxu0 0.0
    %397 = vmatpush1.msra.mxu0 %v377
    %398 = vmatprep.subr.mxu0 0.0
    %399 = vmatpush1.msra.mxu0 %v378
    %400 = vmatprep.subr.mxu0 0.0
    %401 = vmatpush1.msra.mxu0 %v379
    %402 = vmatprep.subr.mxu0 0.0
    %403 = vmatpush1.msra.mxu0 %v380
    %404 = vmatprep.subr.mxu0 0.0
    %405 = vmatpush1.msra.mxu0 %v381
    %406 = vmatprep.subr.mxu0 0.0
    %407 = vmatpush1.msra.mxu0 %v382
    %408 = vmatprep.subr.mxu0 0.0
    %409 = vmatpush1.msra.mxu0 %v383
    %410 = vmatprep.subr.mxu0 0.0
    %411 = vmatpush1.msra.mxu0 %v384
    %412 = vmatprep.subr.mxu0 0.0
    %413 = vmatpush1.msra.mxu0 %v385
    %414 = vmatprep.subr.mxu0 0.0
    %415 = vmatpush1.msra.mxu0 %v386
    %416 = vmatprep.subr.mxu0 0.0
    %417 = vmatpush1.msra.mxu0 %v387
    %418 = vmatprep.subr.mxu0 0.0
    %419 = vmatpush1.msra.mxu0 %v388
    %420 = vmatprep.subr.mxu0 0.0
    %421 = vmatpush1.msra.mxu0 %v389
    %422 = vmatprep.subr.mxu0 0.0
    %423 = vmatpush1.msra.mxu0 0.0
    %424 = vmatprep.subr.mxu0 0.0
    %425 = vmatpush1.msra.mxu0 0.0
    %426 = vmatprep.subr.mxu0 0.0
    %427 = vmatpush1.msra.mxu0 0.0
    %428 = vmatprep.subr.mxu0 0.0
    %429 = vmatpush1.msra.mxu0 0.0
    %430 = vmatprep.subr.mxu0 0.0
    %431 = vmatpush1.msra.mxu0 0.0
    %432 = vmatprep.subr.mxu0 0.0
    %433 = vmatpush1.msra.mxu0 0.0
    %434 = vmatprep.subr.mxu0 0.0
    %435 = vmatpush1.msra.mxu0 0.0
    %436 = vmatprep.subr.mxu0 0.0
    %437 = vmatpush1.msra.mxu0 0.0
    %438 = vmatprep.subr.mxu0 0.0
    %439 = vmatpush1.msra.mxu0 0.0
    %440 = vmatprep.subr.mxu0 0.0
    %441 = vmatpush1.msra.mxu0 0.0
    %442 = vmatprep.subr.mxu0 0.0
    %443 = vmatpush1.msra.mxu0 0.0
    %444 = vmatprep.subr.mxu0 0.0
    %445 = vmatpush1.msra.mxu0 0.0
    %446 = vmatprep.subr.mxu0 0.0
    %447 = vmatpush1.msra.mxu0 0.0
    %448 = vmatprep.subr.mxu0 0.0
    %449 = vmatpush1.msra.mxu0 0.0
    %450 = vmatprep.subr.mxu0 0.0
    %451 = vmatpush1.msra.mxu0 0.0
    %452 = vmatprep.subr.mxu0 0.0
    %453 = vmatpush1.msra.mxu0 0.0
    %454 = vmatprep.mubr.f32.mxu0 0.0
    %455 = vmatmul.mubr.f32.gmra.mrb[0].mxu0 %v216
    %v456 = vpop.f32.mrb[0].mxu0
    %v457 = vadd.f32 0.0, %v456
    %v458 = vpop.f32.mrb[0].mxu0
    %459 = vmatprep.mubr.f32.mxu0 0.0
    %460 = vmatmul.mubr.f32.gmra.mrb[0].mxu0 %v221
    %v461 = vpop.f32.mrb[0].mxu0
    %v462 = vadd.f32 0.0, %v461
    %v463 = vpop.f32.mrb[0].mxu0
    %464 = vmatprep.mubr.f32.mxu0 0.0
    %465 = vmatmul.mubr.f32.gmra.mrb[0].mxu0 %v226
    %v466 = vpop.f32.mrb[0].mxu0
    %v467 = vadd.f32 0.0, %v466
    %v468 = vpop.f32.mrb[0].mxu0
    %469 = vmatprep.mubr.f32.mxu0 0.0
    %470 = vmatmul.mubr.f32.gmra.mrb[0].mxu0 %v231
    %v471 = vpop.f32.mrb[0].mxu0
    %v472 = vadd.f32 0.0, %v471
    %v473 = vpop.f32.mrb[0].mxu0
    %474 = vmatprep.mubr.f32.mxu0 0.0
    %475 = vmatmul.mubr.f32.gmra.mrb[0].mxu0 %v236
    %v476 = vpop.f32.mrb[0].mxu0
    %v477 = vadd.f32 0.0, %v476
    %v478 = vpop.f32.mrb[0].mxu0
    %479 = vmatprep.mubr.f32.mxu0 0.0
    %480 = vmatmul.mubr.f32.gmra.mrb[0].mxu0 %v241
    %v481 = vpop.f32.mrb[0].mxu0
    %v482 = vadd.f32 0.0, %v481
    %v483 = vpop.f32.mrb[0].mxu0
    %484 = vmatprep.mubr.f32.mxu0 0.0
    %485 = vmatmul.mubr.f32.gmra.mrb[0].mxu0 %v246
    %v486 = vpop.f32.mrb[0].mxu0
    %v487 = vadd.f32 0.0, %v486
    %v488 = vpop.f32.mrb[0].mxu0
    %489 = vmatprep.mubr.f32.mxu0 0.0
    %490 = vmatmul.mubr.f32.gmra.mrb[0].mxu0 %v251
    %v491 = vpop.f32.mrb[0].mxu0
    %v492 = vadd.f32 0.0, %v491
    %v493 = vpop.f32.mrb[0].mxu0
    %494 = vmatprep.mubr.f32.mxu0 0.0
    %495 = vmatmul.mubr.f32.gmra.mrb[0].mxu0 %v256
    %v496 = vpop.f32.mrb[0].mxu0
    %v497 = vadd.f32 0.0, %v496
    %v498 = vpop.f32.mrb[0].mxu0
    %499 = vmatprep.mubr.f32.mxu0 0.0
    %500 = vmatmul.mubr.f32.gmra.mrb[0].mxu0 %v261
    %v501 = vpop.f32.mrb[0].mxu0
    %v502 = vadd.f32 0.0, %v501
    %v503 = vpop.f32.mrb[0].mxu0
    %504 = vmatprep.mubr.f32.mxu0 0.0
    %505 = vmatmul.mubr.f32.gmra.mrb[0].mxu0 %v266
    %v506 = vpop.f32.mrb[0].mxu0
    %v507 = vadd.f32 0.0, %v506
    %v508 = vpop.f32.mrb[0].mxu0
    %509 = vmatprep.mubr.f32.mxu0 0.0
    %510 = vmatmul.mubr.f32.gmra.mrb[0].mxu0 %v271
    %v511 = vpop.f32.mrb[0].mxu0
    %v512 = vadd.f32 0.0, %v511
    %v513 = vpop.f32.mrb[0].mxu0
    %514 = vmatprep.mubr.f32.mxu0 0.0
    %515 = vmatmul.mubr.f32.gmra.mrb[0].mxu0 %v276
    %v516 = vpop.f32.mrb[0].mxu0
    %v517 = vadd.f32 0.0, %v516
    %v518 = vpop.f32.mrb[0].mxu0
    %519 = vmatprep.mubr.f32.mxu0 0.0
    %520 = vmatmul.mubr.f32.gmra.mrb[0].mxu0 %v281
    %v521 = vpop.f32.mrb[0].mxu0
    %v522 = vadd.f32 0.0, %v521
    %v523 = vpop.f32.mrb[0].mxu0
    %524 = vmatprep.mubr.f32.mxu0 0.0
    %525 = vmatmul.mubr.f32.gmra.mrb[0].mxu0 %v286
    %v526 = vpop.f32.mrb[0].mxu0
    %v527 = vadd.f32 0.0, %v526
    %v528 = vpop.f32.mrb[0].mxu0
    %529 = vmatprep.mubr.f32.mxu0 0.0
    %530 = vmatmul.mubr.f32.gmra.mrb[0].mxu0 %v291
    %v531 = vpop.f32.mrb[0].mxu0
    %v532 = vadd.f32 0.0, %v531
    %v533 = vpop.f32.mrb[0].mxu0
    %534 = vmatprep.mubr.f32.mxu0 0.0
    %535 = vmatmul.mubr.f32.gmra.mrb[0].mxu0 %v296
    %v536 = vpop.f32.mrb[0].mxu0
    %v537 = vadd.f32 0.0, %v536
    %v538 = vpop.f32.mrb[0].mxu0
    %539 = vmatprep.mubr.f32.mxu0 0.0
    %540 = vmatmul.mubr.f32.gmra.mrb[0].mxu0 %v301
    %v541 = vpop.f32.mrb[0].mxu0
    %v542 = vadd.f32 0.0, %v541
    %v543 = vpop.f32.mrb[0].mxu0
    %544 = vmatprep.mubr.f32.mxu0 0.0
    %545 = vmatmul.mubr.f32.gmra.mrb[0].mxu0 %v306
    %v546 = vpop.f32.mrb[0].mxu0
    %v547 = vadd.f32 0.0, %v546
    %v548 = vpop.f32.mrb[0].mxu0
    %549 = vmatprep.mubr.f32.mxu0 0.0
    %550 = vmatmul.mubr.f32.gmra.mrb[0].mxu0 %v311
    %v551 = vpop.f32.mrb[0].mxu0
    %v552 = vadd.f32 0.0, %v551
    %v553 = vpop.f32.mrb[0].mxu0
    %554 = vmatprep.mubr.f32.mxu0 0.0
    %555 = vmatmul.mubr.f32.gmra.mrb[0].mxu0 %v316
    %v556 = vpop.f32.mrb[0].mxu0
    %v557 = vadd.f32 0.0, %v556
    %v558 = vpop.f32.mrb[0].mxu0
    %559 = vmatprep.mubr.f32.mxu0 0.0
    %560 = vmatmul.mubr.f32.gmra.mrb[0].mxu0 %v321
    %v561 = vpop.f32.mrb[0].mxu0
    %v562 = vadd.f32 0.0, %v561
    %v563 = vpop.f32.mrb[0].mxu0
    %564 = vmatprep.mubr.f32.mxu0 0.0
    %565 = vmatmul.mubr.f32.gmra.mrb[0].mxu0 %v326
    %v566 = vpop.f32.mrb[0].mxu0
    %v567 = vadd.f32 0.0, %v566
    %v568 = vpop.f32.mrb[0].mxu0
    %569 = vmatprep.mubr.f32.mxu0 0.0
    %570 = vmatmul.mubr.f32.gmra.mrb[0].mxu0 %v331
    %v571 = vpop.f32.mrb[0].mxu0
    %v572 = vadd.f32 0.0, %v571
    %v573 = vpop.f32.mrb[0].mxu0
    %574 = vmatprep.mubr.f32.mxu0 0.0
    %575 = vmatmul.mubr.f32.gmra.mrb[0].mxu0 %v336
    %v576 = vpop.f32.mrb[0].mxu0
    %v577 = vadd.f32 0.0, %v576
    %v578 = vpop.f32.mrb[0].mxu0
    %579 = vmatprep.mubr.f32.mxu0 0.0
    %580 = vmatmul.mubr.f32.gmra.mrb[0].mxu0 %v341
    %v581 = vpop.f32.mrb[0].mxu0
    %v582 = vadd.f32 0.0, %v581
    %v583 = vpop.f32.mrb[0].mxu0
    %584 = vmatprep.mubr.f32.mxu0 0.0
    %585 = vmatmul.mubr.f32.gmra.mrb[0].mxu0 %v346
    %v586 = vpop.f32.mrb[0].mxu0
    %v587 = vadd.f32 0.0, %v586
    %v588 = vpop.f32.mrb[0].mxu0
    %589 = vmatprep.mubr.f32.mxu0 0.0
    %590 = vmatmul.mubr.f32.gmra.mrb[0].mxu0 %v351
    %v591 = vpop.f32.mrb[0].mxu0
    %v592 = vadd.f32 0.0, %v591
    %v593 = vpop.f32.mrb[0].mxu0
    %594 = vmatprep.mubr.f32.mxu0 0.0
    %595 = vmatmul.mubr.f32.gmra.mrb[0].mxu0 %v356
    %v596 = vpop.f32.mrb[0].mxu0
    %v597 = vadd.f32 0.0, %v596
    %v598 = vpop.f32.mrb[0].mxu0
    %599 = vmatprep.mubr.f32.mxu0 0.0
    %600 = vmatmul.mubr.f32.gmra.mrb[0].mxu0 %v361
    %v601 = vpop.f32.mrb[0].mxu0
    %v602 = vadd.f32 0.0, %v601
    %v603 = vpop.f32.mrb[0].mxu0
    %604 = vmatprep.mubr.f32.mxu0 0.0
    %605 = vmatmul.mubr.f32.gmra.mrb[0].mxu0 %v366
    %v606 = vpop.f32.mrb[0].mxu0
    %v607 = vadd.f32 0.0, %v606
    %v608 = vpop.f32.mrb[0].mxu0
    %609 = vmatprep.mubr.f32.mxu0 0.0
    %610 = vmatmul.mubr.f32.gmra.mrb[0].mxu0 %v371
    %v611 = vpop.f32.mrb[0].mxu0
    %v612 = vadd.f32 0.0, %v611
    %v613 = vpop.f32.mrb[0].mxu0
    %614 = vdwg.mxu0
    %615 = vst [vmem:[#allocation2] sm:$0xff] %v216
    %616 = vst [vmem:[#allocation2 + $0x8] sm:$0xff] %v221
    %617 = vst [vmem:[#allocation2 + $0x10] sm:$0xff] %v226
    %618 = vst [vmem:[#allocation2 + $0x18] sm:$0xff] %v231
    %619 = vst [vmem:[#allocation2 + $0x20] sm:$0xff] %v236
    %620 = vst [vmem:[#allocation2 + $0x28] sm:$0xff] %v241
    %621 = vst [vmem:[#allocation2 + $0x30] sm:$0xff] %v246
    %622 = vst [vmem:[#allocation2 + $0x38] sm:$0xff] %v251
    %623 = vst [vmem:[#allocation2 + $0x40] sm:$0xff] %v256
    %624 = vst [vmem:[#allocation2 + $0x48] sm:$0xff] %v261
    %625 = vst [vmem:[#allocation2 + $0x50] sm:$0xff] %v266
    %626 = vst [vmem:[#allocation2 + $0x58] sm:$0xff] %v271
    %627 = vst [vmem:[#allocation2 + $0x60] sm:$0xff] %v276
    %628 = vst [vmem:[#allocation2 + $0x68] sm:$0xff] %v281
    %629 = vst [vmem:[#allocation2 + $0x70] sm:$0xff] %v286
    %630 = vst [vmem:[#allocation2 + $0x78] sm:$0xff] %v291
    %631 = vst [vmem:[#allocation2 + $0x80] sm:$0xff] %v296
    %632 = vst [vmem:[#allocation2 + $0x88] sm:$0xff] %v301
    %633 = vst [vmem:[#allocation2 + $0x90] sm:$0xff] %v306
    %634 = vst [vmem:[#allocation2 + $0x98] sm:$0xff] %v311
    %635 = vst [vmem:[#allocation2 + $0xa0] sm:$0xff] %v316
    %636 = vst [vmem:[#allocation2 + $0xa8] sm:$0xff] %v321
    %637 = vst [vmem:[#allocation2 + $0xb0] sm:$0xff] %v326
    %638 = vst [vmem:[#allocation2 + $0xb8] sm:$0xff] %v331
    %639 = vst [vmem:[#allocation2 + $0xc0] sm:$0xff] %v336
    %640 = vst [vmem:[#allocation2 + $0xc8] sm:$0xff] %v341
    %641 = vst [vmem:[#allocation2 + $0xd0] sm:$0xff] %v346
    %642 = vst [vmem:[#allocation2 + $0xd8] sm:$0xff] %v351
    %643 = vst [vmem:[#allocation2 + $0xe0] sm:$0xff] %v356
    %644 = vst [vmem:[#allocation2 + $0xe8] sm:$0xff] %v361
    %645 = vst [vmem:[#allocation2 + $0xf0] sm:$0xff] %v366
    %646 = vst [vmem:[#allocation2 + $0xf8] sm:$0xff] %v371
    %647 = vst [vmem:[#allocation4] sm:$0xff] %v457
    %648 = vst [vmem:[#allocation4 + $0x8] sm:$0xff] %v462
    %649 = vst [vmem:[#allocation4 + $0x10] sm:$0xff] %v467
    %650 = vst [vmem:[#allocation4 + $0x18] sm:$0xff] %v472
    %651 = vst [vmem:[#allocation4 + $0x20] sm:$0xff] %v477
    %652 = vst [vmem:[#allocation4 + $0x28] sm:$0xff] %v482
    %653 = vst [vmem:[#allocation4 + $0x30] sm:$0xff] %v487
    %654 = vst [vmem:[#allocation4 + $0x38] sm:$0xff] %v492
    %655 = vst [vmem:[#allocation4 + $0x40] sm:$0xff] %v497
    %656 = vst [vmem:[#allocation4 + $0x48] sm:$0xff] %v502
    %657 = vst [vmem:[#allocation4 + $0x50] sm:$0xff] %v507
    %658 = vst [vmem:[#allocation4 + $0x58] sm:$0xff] %v512
    %659 = vst [vmem:[#allocation4 + $0x60] sm:$0xff] %v517
    %660 = vst [vmem:[#allocation4 + $0x68] sm:$0xff] %v522
    %661 = vst [vmem:[#allocation4 + $0x70] sm:$0xff] %v527
    %662 = vst [vmem:[#allocation4 + $0x78] sm:$0xff] %v532
    %663 = vst [vmem:[#allocation4 + $0x80] sm:$0xff] %v537
    %664 = vst [vmem:[#allocation4 + $0x88] sm:$0xff] %v542
    %665 = vst [vmem:[#allocation4 + $0x90] sm:$0xff] %v547
    %666 = vst [vmem:[#allocation4 + $0x98] sm:$0xff] %v552
    %667 = vst [vmem:[#allocation4 + $0xa0] sm:$0xff] %v557
    %668 = vst [vmem:[#allocation4 + $0xa8] sm:$0xff] %v562
    %669 = vst [vmem:[#allocation4 + $0xb0] sm:$0xff] %v567
    %670 = vst [vmem:[#allocation4 + $0xb8] sm:$0xff] %v572
    %671 = vst [vmem:[#allocation4 + $0xc0] sm:$0xff] %v577
    %672 = vst [vmem:[#allocation4 + $0xc8] sm:$0xff] %v582
    %673 = vst [vmem:[#allocation4 + $0xd0] sm:$0xff] %v587
    %674 = vst [vmem:[#allocation4 + $0xd8] sm:$0xff] %v592
    %675 = vst [vmem:[#allocation4 + $0xe0] sm:$0xff] %v597
    %676 = vst [vmem:[#allocation4 + $0xe8] sm:$0xff] %v602
    %677 = vst [vmem:[#allocation4 + $0xf0] sm:$0xff] %v607
    %678 = vst [vmem:[#allocation4 + $0xf8] sm:$0xff] %v612
    // Predicated region
    $region14: #{tpu_custom_call.1} parent=1 // pred_check
      _
    $region15: #{tpu_custom_call.1} parent=1 // pred_check_branch
      %680 = sbr.rel (0) target = $region17
    $region16: #{tpu_custom_call.1} parent=1 // pred_region
      %s682 = ssub.s32 4096, 4096
      %683 = vsyncadd [#allocation3], %s682
      %s684 = sshll.u32 [#allocation2], 4
      %s685 = int_to_ptr.vmem [resolvable:$true] %s684
      %690 = dma.vmem_to_hbm [thread:$0]  %s685, 4096, %s3, [#allocation3], 128, 128, 8
    $region17: #{tpu_custom_call.1} parent=1 // pred_fallthru
      _
    // Predicated region
    $region18: #{tpu_custom_call.1} parent=1 // pred_check
      _
    $region19: #{tpu_custom_call.1} parent=1 // pred_check_branch
      %692 = sbr.rel (0) target = $region21
    $region20: #{tpu_custom_call.1} parent=1 // pred_region
      %s694 = ssub.s32 4096, 4096
      %695 = vsyncadd [#allocation5], %s694
      %s696 = sshll.u32 [#allocation4], 4
      %s697 = int_to_ptr.vmem [resolvable:$true] %s696
      %702 = dma.vmem_to_hbm [thread:$0]  %s697, 4096, %s4, [#allocation5], 128, 128, 8
    $region21: #{tpu_custom_call.1} parent=1 // pred_fallthru
      _
    // Predicated region
    $region22: #{tpu_custom_call.1} parent=1 // pred_check
      _
    $region23: #{tpu_custom_call.1} parent=1 // pred_check_branch
      %704 = sbr.rel (0) target = $region25
    $region24: #{tpu_custom_call.1} parent=1 // pred_region
      %705 = dma.done [#allocation3], 4096
    $region25: #{tpu_custom_call.1} parent=1 // pred_fallthru
      _
    // Predicated region
    $region26: #{tpu_custom_call.1} parent=1 // pred_check
      _
    $region27: #{tpu_custom_call.1} parent=1 // pred_check_branch
      %707 = sbr.rel (0) target = $region29
    $region28: #{tpu_custom_call.1} parent=1 // pred_region
      %708 = dma.done [#allocation5], 4096
    $region29: #{tpu_custom_call.1} parent=1 // pred_fallthru
      _
    %709 = vsyncpa [#allocation3], 1
    %710 = vsyncpa [#allocation5], 1

</llo_original>
